<compile_context>
chip_gen: v7x
topology: tpu7x:2x2x1
jax: 0.10.0
libtpu: 0.0.40
codegen_flags: <defaults>
</compile_context>

<pallas_src>
import jax
import jax.numpy as jnp
from jax.experimental import pallas as pl
from jax.experimental.pallas import tpu as pltpu

_LANE = 128       # lane width (last dim)
_SUBLANE = 8      # f32 sublane width (second-to-last dim)
_NEG_INF = -1e30  # finite "minus infinity" used to mask padded logits


def _round_up(x: int, m: int) -> int:
    return ((x + m - 1) // m) * m


# ---------------------------------------------------------------------------
# Fused MLP kernel (whole forward pass in one pallas_call).
# ---------------------------------------------------------------------------
def _make_fused_mlp_kernel(n_layers: int):
    """Builds a kernel with signature kernel(x, w1, b1, ..., wn, bn, out)."""

    def kernel(*refs):
        x_ref = refs[0]           # bf16 [B_pad, F_pad] (pre-cast in wrapper)
        o_ref = refs[-1]          # f32  [B_pad, N_out_pad]
        h = x_ref[...]            # bf16 activations for the first dot
        for i in range(n_layers):
            w_ref = refs[1 + 2 * i]   # bf16 [K_pad, N_pad]
            b_ref = refs[2 + 2 * i]   # f32  [1, N_pad]
            # bf16 operands -> MXU, f32 accumulation.
            y = jnp.dot(h, w_ref[...], preferred_element_type=jnp.float32)
            y = y + b_ref[...]        # f32 epilogue (VPU)
            if i < n_layers - 1:
                # ReLU in f32, cast once for the next MXU operand.
                h = jnp.maximum(y, 0.0).astype(jnp.bfloat16)
            else:
                # Numerically-stable softmax over the (padded) lane dim.
                # Padded columns are exactly -1e30 (zero weight cols + -1e30
                # bias fill), so exp() underflows to exactly 0 there.
                m = jnp.max(y, axis=1, keepdims=True)
                e = jnp.exp(y - m)
                denom = jnp.sum(e, axis=1, keepdims=True)   # [B_pad, 1]
                inv = 1.0 / denom                           # exact, 8 divides
                o_ref[...] = (e * inv).astype(o_ref.dtype)

    return kernel


def _fused_mlp_pallas(x_pad, padded_params):
    """Single fused pallas_call over padded, lane-dense tiles."""
    n_layers = len(padded_params)
    B_pad, F_pad = x_pad.shape
    N_out_pad = padded_params[-1][0].shape[1]

    flat_args = [x_pad]
    in_specs = [pl.BlockSpec((B_pad, F_pad), lambda i: (0, 0))]
    flops = 0
    bytes_accessed = x_pad.size * 2 + B_pad * N_out_pad * 4
    for w, b in padded_params:
        flat_args += [w, b]
        in_specs += [
            pl.BlockSpec(w.shape, lambda i: (0, 0)),
            pl.BlockSpec(b.shape, lambda i: (0, 0)),
        ]
        flops += 2 * B_pad * w.shape[0] * w.shape[1]
        bytes_accessed += w.size * 2 + b.size * 4

    return pl.pallas_call(
        _make_fused_mlp_kernel(n_layers),
        out_shape=jax.ShapeDtypeStruct((B_pad, N_out_pad), jnp.float32),
        grid_spec=pl.GridSpec(
            grid=(1,),
            in_specs=in_specs,
            out_specs=pl.BlockSpec((B_pad, N_out_pad), lambda i: (0, 0)),
        ),
        compiler_params=pltpu.CompilerParams(
            dimension_semantics=("arbitrary",),
        ),
        cost_estimate=pl.CostEstimate(
            flops=flops,
            transcendentals=B_pad * N_out_pad,
            bytes_accessed=bytes_accessed,
        ),
    )(*flat_args)


# ---------------------------------------------------------------------------
# Parameter init (mirrors torch.nn.Linear's uniform init; weights stored
# transposed as [in, out] so the kernel does x @ W directly).
# ---------------------------------------------------------------------------
def init_params(key, in_size, out_size, hidden_sizes):
    params = []
    sizes = list(hidden_sizes) + [out_size]
    fan_in = in_size
    for size in sizes:
        key, kw, kb = jax.random.split(key, 3)
        bound = 1.0 / jnp.sqrt(fan_in)
        w = jax.random.uniform(kw, (fan_in, size), jnp.float32, -bound, bound)
        b = jax.random.uniform(kb, (1, size), jnp.float32, -bound, bound)
        params.append((w, b))
        fan_in = size
    return params


def pad_params(params):
    """ONE-TIME pad/cast (call at init, outside jit).

    Zero-pads weights to 128-aligned widths and casts them to bf16 (MXU
    operand dtype); biases stay f32.  The last layer's padded bias columns
    get -1e30 so the padded logits are effectively -inf for the in-kernel
    softmax.  This is correct ONLY because the padded weight columns are
    exactly zero (invariant relied on by the kernel's softmax mask).
    """
    n = len(params)
    padded = []
    for i, (w, b) in enumerate(params):
        K, N = w.shape
        Kp = _round_up(K, _LANE)
        Np = _round_up(N, _LANE)
        w_p = jnp.zeros((Kp, Np), jnp.float32).at[:K, :N].set(w)
        w_p = w_p.astype(jnp.bfloat16)                       # MXU operand dtype
        fill = _NEG_INF if i == n - 1 else 0.0
        b_p = jnp.full((1, Np), fill, jnp.float32).at[:, :N].set(b)
        padded.append((w_p, b_p))
    return padded


# ---------------------------------------------------------------------------
# Forward: flatten -> pad+cast input -> fused kernel -> (lane-dense slab).
# The padded params are produced once by pad_params() and passed in; the
# jitted path contains no weight reformatting.
# ---------------------------------------------------------------------------
@jax.jit
def forward_padded(x_nchw, padded_params):
    B = x_nchw.shape[0]
    x = x_nchw.reshape(B, -1).astype(jnp.float32)            # flatten(1)
    F = x.shape[1]
    B_pad = _round_up(B, _SUBLANE)
    F_pad = _round_up(F, _LANE)
    # Pad then cast to bf16 so the first matmul needs no in-kernel cast and
    # the input DMA is half the size.
    x_pad = jnp.zeros((B_pad, F_pad), jnp.float32).at[:B, :F].set(x)
    x_pad = x_pad.astype(jnp.bfloat16)
    return _fused_mlp_pallas(x_pad, padded_params)            # [B_pad, 128]


def model_forward(x_nchw, padded_params, out_size):
    """Returns the [B, out_size] softmax output (slice done at the consumer)."""
    out_pad = forward_padded(x_nchw, padded_params)
    return out_pad[: x_nchw.shape[0], :out_size]


def _reference_forward(x_nchw, params):
    """Pure-JAX f32 reference for validation."""
    x = x_nchw.reshape(x_nchw.shape[0], -1)
    n = len(params)
    for i, (w, b) in enumerate(params):
        x = x @ w + b
        if i < n - 1:
            x = jnp.maximum(x, 0.0)
    return jax.nn.softmax(x, axis=1)


if __name__ == "__main__":
    # Small deterministic example consistent with the module:
    # NCHW input [2, 4, 16, 16] -> in_size = 4*16*16 = 1024,
    # hidden_sizes = [32, 32], out_size = 10.
    B, C, H, W = 2, 4, 16, 16
    in_size = C * H * W
    hidden_sizes = [32, 32]
    out_size = 10

    key = jax.random.PRNGKey(0)
    key_x, key_p = jax.random.split(key)
    x = jax.random.normal(key_x, (B, C, H, W), dtype=jnp.float32)
    params = init_params(key_p, in_size, out_size, hidden_sizes)

    # One-time pad/cast of parameters (outside the jitted forward path).
    padded_params = jax.block_until_ready(pad_params(params))

    out = model_forward(x, padded_params, out_size)
    out = jax.block_until_ready(out)

    assert out.shape == (B, out_size), out.shape

    # Row sums ~ 1 (exact-reciprocal softmax normalization).
    row_sums = jnp.sum(out, axis=1)
    assert bool(jnp.all(jnp.abs(row_sums - 1.0) < 1e-4)), row_sums

    # Match the pure-JAX f32 reference (loose tol: bf16 MXU operands).
    ref = _reference_forward(x, params)
    assert bool(jnp.all(jnp.abs(out - ref) < 2e-2)), jnp.max(jnp.abs(out - ref))

    print("KERNEL_OK")
</pallas_src>

<mosaic_0001>
module attributes {stable_mosaic.version = 11 : i64} {
  func.func @kernel(%arg0: i32, %arg1: memref<8x1024xbf16, #tpu.memory_space<vmem>>, %arg2: memref<1024x128xbf16, #tpu.memory_space<vmem>>, %arg3: memref<1x128xf32, #tpu.memory_space<vmem>>, %arg4: memref<128x128xbf16, #tpu.memory_space<vmem>>, %arg5: memref<1x128xf32, #tpu.memory_space<vmem>>, %arg6: memref<128x128xbf16, #tpu.memory_space<vmem>>, %arg7: memref<1x128xf32, #tpu.memory_space<vmem>>, %arg8: memref<8x128xf32, #tpu.memory_space<vmem>>) attributes {dimension_semantics = [#tpu.dimension_semantics<arbitrary>], iteration_bounds = array<i64: 1>, scalar_prefetch = 0 : i64, scratch_operands = 0 : i64, tpu.core_type = #tpu.core_type<tc>, window_params = [{pipeline_mode = #tpu.pipeline_mode<synchronous>, transform_indices = @transform_0, window_bounds = array<i64: 8, 1024>}, {pipeline_mode = #tpu.pipeline_mode<synchronous>, transform_indices = @transform_1, window_bounds = array<i64: 1024, 128>}, {pipeline_mode = #tpu.pipeline_mode<synchronous>, transform_indices = @transform_2, window_bounds = array<i64: 1, 128>}, {pipeline_mode = #tpu.pipeline_mode<synchronous>, transform_indices = @transform_3, window_bounds = array<i64: 128, 128>}, {pipeline_mode = #tpu.pipeline_mode<synchronous>, transform_indices = @transform_4, window_bounds = array<i64: 1, 128>}, {pipeline_mode = #tpu.pipeline_mode<synchronous>, transform_indices = @transform_5, window_bounds = array<i64: 128, 128>}, {pipeline_mode = #tpu.pipeline_mode<synchronous>, transform_indices = @transform_6, window_bounds = array<i64: 1, 128>}, {pipeline_mode = #tpu.pipeline_mode<synchronous>, transform_indices = @transform_7, window_bounds = array<i64: 8, 128>}]} {
    %c0 = arith.constant 0 : index
    %c0_0 = arith.constant 0 : index
    %0 = vector.load %arg1[%c0, %c0_0] : memref<8x1024xbf16, #tpu.memory_space<vmem>>, vector<8x1024xbf16>
    %c0_1 = arith.constant 0 : index
    %c0_2 = arith.constant 0 : index
    %1 = vector.load %arg2[%c0_1, %c0_2] : memref<1024x128xbf16, #tpu.memory_space<vmem>>, vector<1024x128xbf16>
    %cst = arith.constant dense<0.000000e+00> : vector<8x128xf32>
    %2 = tpu.matmul %0, %1, %cst {dimension_numbers = #tpu.dot_dimension_numbers<[1], [0], [0], [1], [0, 0, 1, 1], [], []>} : vector<8x1024xbf16>, vector<1024x128xbf16>, vector<8x128xf32> -> vector<8x128xf32>
    %c0_3 = arith.constant 0 : index
    %c0_4 = arith.constant 0 : index
    %3 = vector.load %arg3[%c0_3, %c0_4] : memref<1x128xf32, #tpu.memory_space<vmem>>, vector<1x128xf32>
    %4 = vector.broadcast %3 : vector<1x128xf32> to vector<8x128xf32>
    %5 = arith.addf %2, %4 : vector<8x128xf32>
    %cst_5 = arith.constant 0.000000e+00 : f32
    %6 = vector.broadcast %cst_5 : f32 to vector<8x128xf32>
    %7 = arith.maximumf %5, %6 : vector<8x128xf32>
    %8 = arith.truncf %7 : vector<8x128xf32> to vector<8x128xbf16>
    %c0_6 = arith.constant 0 : index
    %c0_7 = arith.constant 0 : index
    %9 = vector.load %arg4[%c0_6, %c0_7] : memref<128x128xbf16, #tpu.memory_space<vmem>>, vector<128x128xbf16>
    %cst_8 = arith.constant dense<0.000000e+00> : vector<8x128xf32>
    %10 = tpu.matmul %8, %9, %cst_8 {dimension_numbers = #tpu.dot_dimension_numbers<[1], [0], [0], [1], [0, 0, 1, 1], [], []>} : vector<8x128xbf16>, vector<128x128xbf16>, vector<8x128xf32> -> vector<8x128xf32>
    %c0_9 = arith.constant 0 : index
    %c0_10 = arith.constant 0 : index
    %11 = vector.load %arg5[%c0_9, %c0_10] : memref<1x128xf32, #tpu.memory_space<vmem>>, vector<1x128xf32>
    %12 = vector.broadcast %11 : vector<1x128xf32> to vector<8x128xf32>
    %13 = arith.addf %10, %12 : vector<8x128xf32>
    %cst_11 = arith.constant 0.000000e+00 : f32
    %14 = vector.broadcast %cst_11 : f32 to vector<8x128xf32>
    %15 = arith.maximumf %13, %14 : vector<8x128xf32>
    %16 = arith.truncf %15 : vector<8x128xf32> to vector<8x128xbf16>
    %c0_12 = arith.constant 0 : index
    %c0_13 = arith.constant 0 : index
    %17 = vector.load %arg6[%c0_12, %c0_13] : memref<128x128xbf16, #tpu.memory_space<vmem>>, vector<128x128xbf16>
    %cst_14 = arith.constant dense<0.000000e+00> : vector<8x128xf32>
    %18 = tpu.matmul %16, %17, %cst_14 {dimension_numbers = #tpu.dot_dimension_numbers<[1], [0], [0], [1], [0, 0, 1, 1], [], []>} : vector<8x128xbf16>, vector<128x128xbf16>, vector<8x128xf32> -> vector<8x128xf32>
    %c0_15 = arith.constant 0 : index
    %c0_16 = arith.constant 0 : index
    %19 = vector.load %arg7[%c0_15, %c0_16] : memref<1x128xf32, #tpu.memory_space<vmem>>, vector<1x128xf32>
    %20 = vector.broadcast %19 : vector<1x128xf32> to vector<8x128xf32>
    %21 = arith.addf %18, %20 : vector<8x128xf32>
    %cst_17 = arith.constant dense<0xFF800000> : vector<8xf32>
    %22 = vector.multi_reduction <maximumf>, %21, %cst_17 [1] : vector<8x128xf32> to vector<8xf32>
    %23 = vector.shape_cast %22 : vector<8xf32> to vector<8x1xf32>
    %24 = vector.broadcast %23 : vector<8x1xf32> to vector<8x128xf32>
    %25 = arith.subf %21, %24 : vector<8x128xf32>
    %26 = math.exp %25 : vector<8x128xf32>
    %cst_18 = arith.constant dense<0.000000e+00> : vector<8xf32>
    %27 = vector.multi_reduction <add>, %26, %cst_18 [1] : vector<8x128xf32> to vector<8xf32>
    %28 = vector.shape_cast %27 : vector<8xf32> to vector<8x1xf32>
    %cst_19 = arith.constant 1.000000e+00 : f32
    %29 = vector.broadcast %cst_19 : f32 to vector<8x1xf32>
    %30 = arith.divf %29, %28 : vector<8x1xf32>
    %31 = vector.broadcast %30 : vector<8x1xf32> to vector<8x128xf32>
    %32 = arith.mulf %26, %31 : vector<8x128xf32>
    %c0_20 = arith.constant 0 : index
    %c0_21 = arith.constant 0 : index
    %33 = vector.load %arg8[%c0_20, %c0_21] : memref<8x128xf32, #tpu.memory_space<vmem>>, vector<8x128xf32>
    tpu.vector_store %arg8[%c0_20, %c0_21], %32 {strides = array<i32>} : memref<8x128xf32, #tpu.memory_space<vmem>>, vector<8x128xf32>,
    return
  }
  func.func @transform_0(%arg0: i32) -> (i32, i32) {
    %c0_i32 = arith.constant 0 : i32
    %c0_i32_0 = arith.constant 0 : i32
    %c0_i32_1 = arith.constant 0 : i32
    return %c0_i32, %c0_i32_0 : i32, i32
  }
  func.func @transform_1(%arg0: i32) -> (i32, i32) {
    %c0_i32 = arith.constant 0 : i32
    %c0_i32_0 = arith.constant 0 : i32
    %c0_i32_1 = arith.constant 0 : i32
    return %c0_i32, %c0_i32_0 : i32, i32
  }
  func.func @transform_2(%arg0: i32) -> (i32, i32) {
    %c0_i32 = arith.constant 0 : i32
    %c0_i32_0 = arith.constant 0 : i32
    %c0_i32_1 = arith.constant 0 : i32
    return %c0_i32, %c0_i32_0 : i32, i32
  }
  func.func @transform_3(%arg0: i32) -> (i32, i32) {
    %c0_i32 = arith.constant 0 : i32
    %c0_i32_0 = arith.constant 0 : i32
    %c0_i32_1 = arith.constant 0 : i32
    return %c0_i32, %c0_i32_0 : i32, i32
  }
  func.func @transform_4(%arg0: i32) -> (i32, i32) {
    %c0_i32 = arith.constant 0 : i32
    %c0_i32_0 = arith.constant 0 : i32
    %c0_i32_1 = arith.constant 0 : i32
    return %c0_i32, %c0_i32_0 : i32, i32
  }
  func.func @transform_5(%arg0: i32) -> (i32, i32) {
    %c0_i32 = arith.constant 0 : i32
    %c0_i32_0 = arith.constant 0 : i32
    %c0_i32_1 = arith.constant 0 : i32
    return %c0_i32, %c0_i32_0 : i32, i32
  }
  func.func @transform_6(%arg0: i32) -> (i32, i32) {
    %c0_i32 = arith.constant 0 : i32
    %c0_i32_0 = arith.constant 0 : i32
    %c0_i32_1 = arith.constant 0 : i32
    return %c0_i32, %c0_i32_0 : i32, i32
  }
  func.func @transform_7(%arg0: i32) -> (i32, i32) {
    %c0_i32 = arith.constant 0 : i32
    %c0_i32_0 = arith.constant 0 : i32
    %c0_i32_1 = arith.constant 0 : i32
    return %c0_i32, %c0_i32_0 : i32, i32
  }
}

</mosaic_0001>

<llo_original>
// kernel: forward_padded.1
$region0: #{forward_padded.1}
  #allocation0 [shape = 'u32[]', space=smem, size = 0x4, offset = 0x4, fixed_abs, tag = 'smem constant byte address 0x4 - core index']
  #allocation1 [shape = 'u32[144,128]{1,0:T(1,128)}', space=vmem, size = 0x12000, scoped, tag = 'internal scratch']
  %s0 = inlined_call_operand.vmem [shape: bf16[8,1024], index: 0, kind: input, shape index: {}]
  %s1 = inlined_call_operand.hbm [shape: bf16[1024,128], index: 1, kind: input, shape index: {}]
  %s2 = inlined_call_operand.vmem [shape: f32[1,128], index: 2, kind: input, shape index: {}]
  %s3 = inlined_call_operand.vmem [shape: bf16[128,128], index: 3, kind: input, shape index: {}]
  %s4 = inlined_call_operand.vmem [shape: f32[1,128], index: 4, kind: input, shape index: {}]
  %s5 = inlined_call_operand.vmem [shape: bf16[128,128], index: 5, kind: input, shape index: {}]
  %s6 = inlined_call_operand.vmem [shape: f32[1,128], index: 6, kind: input, shape index: {}]
  %s7 = inlined_call_operand.hbm [shape: f32[8,128], index: 7, kind: output, shape index: {}]
  %s8 = sld [smem:[#allocation0]]
  $region42: #{forward_padded.1} parent=0
    _
  %s10 = ssub.s32 1, %s8
  %s11 = scalar_select 0, %s10, %s8
  $region1: #{forward_padded.1} parent=0
    #allocation2 [shape = 'u8[262144]{0}', space=vmem, size = 0x40000, scoped, tag = 'input window, operand 1, single buffered']
    #allocation3 [shape = 's32[1]{0}', space=sflag, size = 0x4, scoped, tag = 'scoped memory for forward_padded.1']
    #allocation4 [shape = 's32[1]{0}', space=sflag, size = 0x4, scoped, tag = 'scoped memory for forward_padded.1']
    #allocation5 [shape = 'u8[4096]{0}', space=vmem, size = 0x1000, scoped, tag = 'output window, operand 0, single buffered']
    %12 = vsyncpa [#allocation3], 0
    %13 = vsyncpa [#allocation4], 0
    // Predicated region
    $region2: #{forward_padded.1} parent=1 // pred_check
      _
    $region3: #{forward_padded.1} parent=1 // pred_check_branch
      %15 = sbr.rel (0) target = $region5
    $region4: #{forward_padded.1} parent=1 // pred_region
      _
    $region5: #{forward_padded.1} parent=1 // pred_fallthru
      _
    // Predicated region
    $region6: #{forward_padded.1} parent=1 // pred_check
      _
    $region7: #{forward_padded.1} parent=1 // pred_check_branch
      %17 = sbr.rel (0) target = $region9
    $region8: #{forward_padded.1} parent=1 // pred_region
      %s19 = ssub.s32 8192, 8192
      %20 = vsyncadd [#allocation3], %s19
      %s21 = sshll.u32 [#allocation2], 4
      %s22 = int_to_ptr.vmem [resolvable:$true] %s21
      %27 = dma.hbm_to_vmem [thread:$0]  %s1, 8192, %s22, [#allocation3], 64, 64, 4
    $region9: #{forward_padded.1} parent=1 // pred_fallthru
      _
    // Predicated region
    $region10: #{forward_padded.1} parent=1 // pred_check
      _
    $region11: #{forward_padded.1} parent=1 // pred_check_branch
      %29 = sbr.rel (0) target = $region13
    $region12: #{forward_padded.1} parent=1 // pred_region
      _
    $region13: #{forward_padded.1} parent=1 // pred_fallthru
      _
    // Predicated region
    $region14: #{forward_padded.1} parent=1 // pred_check
      _
    $region15: #{forward_padded.1} parent=1 // pred_check_branch
      %31 = sbr.rel (0) target = $region17
    $region16: #{forward_padded.1} parent=1 // pred_region
      _
    $region17: #{forward_padded.1} parent=1 // pred_fallthru
      _
    // Predicated region
    $region18: #{forward_padded.1} parent=1 // pred_check
      _
    $region19: #{forward_padded.1} parent=1 // pred_check_branch
      %33 = sbr.rel (0) target = $region21
    $region20: #{forward_padded.1} parent=1 // pred_region
      _
    $region21: #{forward_padded.1} parent=1 // pred_fallthru
      _
    // Predicated region
    $region22: #{forward_padded.1} parent=1 // pred_check
      _
    $region23: #{forward_padded.1} parent=1 // pred_check_branch
      %35 = sbr.rel (0) target = $region25
    $region24: #{forward_padded.1} parent=1 // pred_region
      _
    $region25: #{forward_padded.1} parent=1 // pred_fallthru
      _
    // Predicated region
    $region26: #{forward_padded.1} parent=1 // pred_check
      _
    $region27: #{forward_padded.1} parent=1 // pred_check_branch
      %37 = sbr.rel (0) target = $region29
    $region28: #{forward_padded.1} parent=1 // pred_region
      _
    $region29: #{forward_padded.1} parent=1 // pred_fallthru
      _
    // Predicated region
    $region30: #{forward_padded.1} parent=1 // pred_check
      _
    $region31: #{forward_padded.1} parent=1 // pred_check_branch
      %39 = sbr.rel (0) target = $region33
    $region32: #{forward_padded.1} parent=1 // pred_region
      %40 = dma.done [#allocation3], 8192
    $region33: #{forward_padded.1} parent=1 // pred_fallthru
      _
    %v42 = vld [vmem:[%s0] sm:$0xff]
    %v43 = vld [vmem:[%s0 + $0x8] sm:$0xff]
    %v44 = vld [vmem:[%s0 + $0x10] sm:$0xff]
    %v45 = vld [vmem:[%s0 + $0x18] sm:$0xff]
    %v46 = vld [vmem:[#allocation2] sm:$0xf]
    %v47 = vld [vmem:[#allocation2 + $0x4] sm:$0xf]
    %v48 = vld [vmem:[#allocation2 + $0x8] sm:$0xf]
    %v49 = vld [vmem:[#allocation2 + $0xc] sm:$0xf]
    %v50 = vld [vmem:[#allocation2 + $0x10] sm:$0xf]
    %v51 = vld [vmem:[#allocation2 + $0x14] sm:$0xf]
    %v52 = vld [vmem:[#allocation2 + $0x18] sm:$0xf]
    %v53 = vld [vmem:[#allocation2 + $0x1c] sm:$0xf]
    %v54 = vld [vmem:[#allocation2 + $0x20] sm:$0xf]
    %v55 = vld [vmem:[#allocation2 + $0x24] sm:$0xf]
    %v56 = vld [vmem:[#allocation2 + $0x28] sm:$0xf]
    %v57 = vld [vmem:[#allocation2 + $0x2c] sm:$0xf]
    %v58 = vld [vmem:[#allocation2 + $0x30] sm:$0xf]
    %v59 = vld [vmem:[#allocation2 + $0x34] sm:$0xf]
    %v60 = vld [vmem:[#allocation2 + $0x38] sm:$0xf]
    %v61 = vld [vmem:[#allocation2 + $0x3c] sm:$0xf]
    %v62 = vld [vmem:[#allocation2 + $0x40] sm:$0xf]
    %v63 = vld [vmem:[#allocation2 + $0x44] sm:$0xf]
    %v64 = vld [vmem:[#allocation2 + $0x48] sm:$0xf]
    %v65 = vld [vmem:[#allocation2 + $0x4c] sm:$0xf]
    %v66 = vld [vmem:[#allocation2 + $0x50] sm:$0xf]
    %v67 = vld [vmem:[#allocation2 + $0x54] sm:$0xf]
    %v68 = vld [vmem:[#allocation2 + $0x58] sm:$0xf]
    %v69 = vld [vmem:[#allocation2 + $0x5c] sm:$0xf]
    %v70 = vld [vmem:[#allocation2 + $0x60] sm:$0xf]
    %v71 = vld [vmem:[#allocation2 + $0x64] sm:$0xf]
    %v72 = vld [vmem:[#allocation2 + $0x68] sm:$0xf]
    %v73 = vld [vmem:[#allocation2 + $0x6c] sm:$0xf]
    %v74 = vld [vmem:[#allocation2 + $0x70] sm:$0xf]
    %v75 = vld [vmem:[#allocation2 + $0x74] sm:$0xf]
    %v76 = vld [vmem:[#allocation2 + $0x78] sm:$0xf]
    %v77 = vld [vmem:[#allocation2 + $0x7c] sm:$0xf]
    %v78 = vld [vmem:[#allocation2 + $0x80] sm:$0xf]
    %v79 = vld [vmem:[#allocation2 + $0x84] sm:$0xf]
    %v80 = vld [vmem:[#allocation2 + $0x88] sm:$0xf]
    %v81 = vld [vmem:[#allocation2 + $0x8c] sm:$0xf]
    %v82 = vld [vmem:[#allocation2 + $0x90] sm:$0xf]
    %v83 = vld [vmem:[#allocation2 + $0x94] sm:$0xf]
    %v84 = vld [vmem:[#allocation2 + $0x98] sm:$0xf]
    %v85 = vld [vmem:[#allocation2 + $0x9c] sm:$0xf]
    %v86 = vld [vmem:[#allocation2 + $0xa0] sm:$0xf]
    %v87 = vld [vmem:[#allocation2 + $0xa4] sm:$0xf]
    %v88 = vld [vmem:[#allocation2 + $0xa8] sm:$0xf]
    %v89 = vld [vmem:[#allocation2 + $0xac] sm:$0xf]
    %v90 = vld [vmem:[#allocation2 + $0xb0] sm:$0xf]
    %v91 = vld [vmem:[#allocation2 + $0xb4] sm:$0xf]
    %v92 = vld [vmem:[#allocation2 + $0xb8] sm:$0xf]
    %v93 = vld [vmem:[#allocation2 + $0xbc] sm:$0xf]
    %v94 = vld [vmem:[#allocation2 + $0xc0] sm:$0xf]
    %v95 = vld [vmem:[#allocation2 + $0xc4] sm:$0xf]
    %v96 = vld [vmem:[#allocation2 + $0xc8] sm:$0xf]
    %v97 = vld [vmem:[#allocation2 + $0xcc] sm:$0xf]
    %v98 = vld [vmem:[#allocation2 + $0xd0] sm:$0xf]
    %v99 = vld [vmem:[#allocation2 + $0xd4] sm:$0xf]
    %v100 = vld [vmem:[#allocation2 + $0xd8] sm:$0xf]
    %v101 = vld [vmem:[#allocation2 + $0xdc] sm:$0xf]
    %v102 = vld [vmem:[#allocation2 + $0xe0] sm:$0xf]
    %v103 = vld [vmem:[#allocation2 + $0xe4] sm:$0xf]
    %v104 = vld [vmem:[#allocation2 + $0xe8] sm:$0xf]
    %v105 = vld [vmem:[#allocation2 + $0xec] sm:$0xf]
    %v106 = vld [vmem:[#allocation2 + $0xf0] sm:$0xf]
    %v107 = vld [vmem:[#allocation2 + $0xf4] sm:$0xf]
    %v108 = vld [vmem:[#allocation2 + $0xf8] sm:$0xf]
    %v109 = vld [vmem:[#allocation2 + $0xfc] sm:$0xf]
    %v110 = vld [vmem:[#allocation2 + $0x100] sm:$0xf]
    %v111 = vld [vmem:[#allocation2 + $0x104] sm:$0xf]
    %v112 = vld [vmem:[#allocation2 + $0x108] sm:$0xf]
    %v113 = vld [vmem:[#allocation2 + $0x10c] sm:$0xf]
    %v114 = vld [vmem:[#allocation2 + $0x110] sm:$0xf]
    %v115 = vld [vmem:[#allocation2 + $0x114] sm:$0xf]
    %v116 = vld [vmem:[#allocation2 + $0x118] sm:$0xf]
    %v117 = vld [vmem:[#allocation2 + $0x11c] sm:$0xf]
    %v118 = vld [vmem:[#allocation2 + $0x120] sm:$0xf]
    %v119 = vld [vmem:[#allocation2 + $0x124] sm:$0xf]
    %v120 = vld [vmem:[#allocation2 + $0x128] sm:$0xf]
    %v121 = vld [vmem:[#allocation2 + $0x12c] sm:$0xf]
    %v122 = vld [vmem:[#allocation2 + $0x130] sm:$0xf]
    %v123 = vld [vmem:[#allocation2 + $0x134] sm:$0xf]
    %v124 = vld [vmem:[#allocation2 + $0x138] sm:$0xf]
    %v125 = vld [vmem:[#allocation2 + $0x13c] sm:$0xf]
    %v126 = vld [vmem:[#allocation2 + $0x140] sm:$0xf]
    %v127 = vld [vmem:[#allocation2 + $0x144] sm:$0xf]
    %v128 = vld [vmem:[#allocation2 + $0x148] sm:$0xf]
    %v129 = vld [vmem:[#allocation2 + $0x14c] sm:$0xf]
    %v130 = vld [vmem:[#allocation2 + $0x150] sm:$0xf]
    %v131 = vld [vmem:[#allocation2 + $0x154] sm:$0xf]
    %v132 = vld [vmem:[#allocation2 + $0x158] sm:$0xf]
    %v133 = vld [vmem:[#allocation2 + $0x15c] sm:$0xf]
    %v134 = vld [vmem:[#allocation2 + $0x160] sm:$0xf]
    %v135 = vld [vmem:[#allocation2 + $0x164] sm:$0xf]
    %v136 = vld [vmem:[#allocation2 + $0x168] sm:$0xf]
    %v137 = vld [vmem:[#allocation2 + $0x16c] sm:$0xf]
    %v138 = vld [vmem:[#allocation2 + $0x170] sm:$0xf]
    %v139 = vld [vmem:[#allocation2 + $0x174] sm:$0xf]
    %v140 = vld [vmem:[#allocation2 + $0x178] sm:$0xf]
    %v141 = vld [vmem:[#allocation2 + $0x17c] sm:$0xf]
    %v142 = vld [vmem:[#allocation2 + $0x180] sm:$0xf]
    %v143 = vld [vmem:[#allocation2 + $0x184] sm:$0xf]
    %v144 = vld [vmem:[#allocation2 + $0x188] sm:$0xf]
    %v145 = vld [vmem:[#allocation2 + $0x18c] sm:$0xf]
    %v146 = vld [vmem:[#allocation2 + $0x190] sm:$0xf]
    %v147 = vld [vmem:[#allocation2 + $0x194] sm:$0xf]
    %v148 = vld [vmem:[#allocation2 + $0x198] sm:$0xf]
    %v149 = vld [vmem:[#allocation2 + $0x19c] sm:$0xf]
    %v150 = vld [vmem:[#allocation2 + $0x1a0] sm:$0xf]
    %v151 = vld [vmem:[#allocation2 + $0x1a4] sm:$0xf]
    %v152 = vld [vmem:[#allocation2 + $0x1a8] sm:$0xf]
    %v153 = vld [vmem:[#allocation2 + $0x1ac] sm:$0xf]
    %v154 = vld [vmem:[#allocation2 + $0x1b0] sm:$0xf]
    %v155 = vld [vmem:[#allocation2 + $0x1b4] sm:$0xf]
    %v156 = vld [vmem:[#allocation2 + $0x1b8] sm:$0xf]
    %v157 = vld [vmem:[#allocation2 + $0x1bc] sm:$0xf]
    %v158 = vld [vmem:[#allocation2 + $0x1c0] sm:$0xf]
    %v159 = vld [vmem:[#allocation2 + $0x1c4] sm:$0xf]
    %v160 = vld [vmem:[#allocation2 + $0x1c8] sm:$0xf]
    %v161 = vld [vmem:[#allocation2 + $0x1cc] sm:$0xf]
    %v162 = vld [vmem:[#allocation2 + $0x1d0] sm:$0xf]
    %v163 = vld [vmem:[#allocation2 + $0x1d4] sm:$0xf]
    %v164 = vld [vmem:[#allocation2 + $0x1d8] sm:$0xf]
    %v165 = vld [vmem:[#allocation2 + $0x1dc] sm:$0xf]
    %v166 = vld [vmem:[#allocation2 + $0x1e0] sm:$0xf]
    %v167 = vld [vmem:[#allocation2 + $0x1e4] sm:$0xf]
    %v168 = vld [vmem:[#allocation2 + $0x1e8] sm:$0xf]
    %v169 = vld [vmem:[#allocation2 + $0x1ec] sm:$0xf]
    %v170 = vld [vmem:[#allocation2 + $0x1f0] sm:$0xf]
    %v171 = vld [vmem:[#allocation2 + $0x1f4] sm:$0xf]
    %v172 = vld [vmem:[#allocation2 + $0x1f8] sm:$0xf]
    %v173 = vld [vmem:[#allocation2 + $0x1fc] sm:$0xf]
    %v174 = vld [vmem:[%s2] sm:$0x1]
    %v176 = vlaneseq
    %v177 = vshrl.u32 %v176, 7
    %v178 = vsub.s32 0, %v177
    %v179 = vrot.slane %v174, %v178
    %v185 = vunpack.c.l.b16 %v42
    %v186 = vunpack.c.h.b16 %v42
    %v187 = vunpack.c.l.b16 %v43
    %v188 = vunpack.c.h.b16 %v43
    %v189 = vunpack.c.l.b16 %v44
    %v190 = vunpack.c.h.b16 %v44
    %v191 = vunpack.c.l.b16 %v45
    %v192 = vunpack.c.h.b16 %v45
    %v193 = vpack.c.b16 %v185, %v185
    %v194 = vpack.c.b16 %v186, %v186
    %v195 = vpack.c.b16 %v187, %v187
    %v196 = vpack.c.b16 %v188, %v188
    %v197 = vpack.c.b16 %v189, %v189
    %v198 = vpack.c.b16 %v190, %v190
    %v199 = vpack.c.b16 %v191, %v191
    %v200 = vpack.c.b16 %v192, %v192
    %v337 = vunpack.c.l.b16 %v46
    %v338 = vunpack.c.l.b16 %v47
    %v339 = vunpack.c.l.b16 %v48
    %v340 = vunpack.c.l.b16 %v49
    %v341 = vunpack.c.l.b16 %v50
    %v342 = vunpack.c.l.b16 %v51
    %v343 = vunpack.c.l.b16 %v52
    %v344 = vunpack.c.l.b16 %v53
    %v345 = vunpack.c.l.b16 %v54
    %v346 = vunpack.c.l.b16 %v55
    %v347 = vunpack.c.l.b16 %v56
    %v348 = vunpack.c.l.b16 %v57
    %v349 = vunpack.c.l.b16 %v58
    %v350 = vunpack.c.l.b16 %v59
    %v351 = vunpack.c.l.b16 %v60
    %v352 = vunpack.c.l.b16 %v61
    %v353 = vunpack.c.l.b16 %v62
    %v354 = vunpack.c.l.b16 %v63
    %v355 = vunpack.c.l.b16 %v64
    %v356 = vunpack.c.l.b16 %v65
    %v357 = vunpack.c.l.b16 %v66
    %v358 = vunpack.c.l.b16 %v67
    %v359 = vunpack.c.l.b16 %v68
    %v360 = vunpack.c.l.b16 %v69
    %v361 = vunpack.c.l.b16 %v70
    %v362 = vunpack.c.l.b16 %v71
    %v363 = vunpack.c.l.b16 %v72
    %v364 = vunpack.c.l.b16 %v73
    %v365 = vunpack.c.l.b16 %v74
    %v366 = vunpack.c.l.b16 %v75
    %v367 = vunpack.c.l.b16 %v76
    %v368 = vunpack.c.l.b16 %v77
    %v369 = vunpack.c.l.b16 %v78
    %v370 = vunpack.c.l.b16 %v79
    %v371 = vunpack.c.l.b16 %v80
    %v372 = vunpack.c.l.b16 %v81
    %v373 = vunpack.c.l.b16 %v82
    %v374 = vunpack.c.l.b16 %v83
    %v375 = vunpack.c.l.b16 %v84
    %v376 = vunpack.c.l.b16 %v85
    %v377 = vunpack.c.l.b16 %v86
    %v378 = vunpack.c.l.b16 %v87
    %v379 = vunpack.c.l.b16 %v88
    %v380 = vunpack.c.l.b16 %v89
    %v381 = vunpack.c.l.b16 %v90
    %v382 = vunpack.c.l.b16 %v91
    %v383 = vunpack.c.l.b16 %v92
    %v384 = vunpack.c.l.b16 %v93
    %v385 = vunpack.c.l.b16 %v94
    %v386 = vunpack.c.l.b16 %v95
    %v387 = vunpack.c.l.b16 %v96
    %v388 = vunpack.c.l.b16 %v97
    %v389 = vunpack.c.l.b16 %v98
    %v390 = vunpack.c.l.b16 %v99
    %v391 = vunpack.c.l.b16 %v100
    %v392 = vunpack.c.l.b16 %v101
    %v393 = vunpack.c.l.b16 %v102
    %v394 = vunpack.c.l.b16 %v103
    %v395 = vunpack.c.l.b16 %v104
    %v396 = vunpack.c.l.b16 %v105
    %v397 = vunpack.c.l.b16 %v106
    %v398 = vunpack.c.l.b16 %v107
    %v399 = vunpack.c.l.b16 %v108
    %v400 = vunpack.c.l.b16 %v109
    %v401 = vunpack.c.l.b16 %v110
    %v402 = vunpack.c.l.b16 %v111
    %v403 = vunpack.c.l.b16 %v112
    %v404 = vunpack.c.l.b16 %v113
    %v405 = vunpack.c.l.b16 %v114
    %v406 = vunpack.c.l.b16 %v115
    %v407 = vunpack.c.l.b16 %v116
    %v408 = vunpack.c.l.b16 %v117
    %v409 = vunpack.c.l.b16 %v118
    %v410 = vunpack.c.l.b16 %v119
    %v411 = vunpack.c.l.b16 %v120
    %v412 = vunpack.c.l.b16 %v121
    %v413 = vunpack.c.l.b16 %v122
    %v414 = vunpack.c.l.b16 %v123
    %v415 = vunpack.c.l.b16 %v124
    %v416 = vunpack.c.l.b16 %v125
    %v417 = vunpack.c.l.b16 %v126
    %v418 = vunpack.c.l.b16 %v127
    %v419 = vunpack.c.l.b16 %v128
    %v420 = vunpack.c.l.b16 %v129
    %v421 = vunpack.c.l.b16 %v130
    %v422 = vunpack.c.l.b16 %v131
    %v423 = vunpack.c.l.b16 %v132
    %v424 = vunpack.c.l.b16 %v133
    %v425 = vunpack.c.l.b16 %v134
    %v426 = vunpack.c.l.b16 %v135
    %v427 = vunpack.c.l.b16 %v136
    %v428 = vunpack.c.l.b16 %v137
    %v429 = vunpack.c.l.b16 %v138
    %v430 = vunpack.c.l.b16 %v139
    %v431 = vunpack.c.l.b16 %v140
    %v432 = vunpack.c.l.b16 %v141
    %v433 = vunpack.c.l.b16 %v142
    %v434 = vunpack.c.l.b16 %v143
    %v435 = vunpack.c.l.b16 %v144
    %v436 = vunpack.c.l.b16 %v145
    %v437 = vunpack.c.l.b16 %v146
    %v438 = vunpack.c.l.b16 %v147
    %v439 = vunpack.c.l.b16 %v148
    %v440 = vunpack.c.l.b16 %v149
    %v441 = vunpack.c.l.b16 %v150
    %v442 = vunpack.c.l.b16 %v151
    %v443 = vunpack.c.l.b16 %v152
    %v444 = vunpack.c.l.b16 %v153
    %v445 = vunpack.c.l.b16 %v154
    %v446 = vunpack.c.l.b16 %v155
    %v447 = vunpack.c.l.b16 %v156
    %v448 = vunpack.c.l.b16 %v157
    %v449 = vunpack.c.l.b16 %v158
    %v450 = vunpack.c.l.b16 %v159
    %v451 = vunpack.c.l.b16 %v160
    %v452 = vunpack.c.l.b16 %v161
    %v453 = vunpack.c.l.b16 %v162
    %v454 = vunpack.c.l.b16 %v163
    %v455 = vunpack.c.l.b16 %v164
    %v456 = vunpack.c.l.b16 %v165
    %v457 = vunpack.c.l.b16 %v166
    %v458 = vunpack.c.l.b16 %v167
    %v459 = vunpack.c.l.b16 %v168
    %v460 = vunpack.c.l.b16 %v169
    %v461 = vunpack.c.l.b16 %v170
    %v462 = vunpack.c.l.b16 %v171
    %v463 = vunpack.c.l.b16 %v172
    %v464 = vunpack.c.l.b16 %v173
    %v465 = vpack.c.b16 %v338, %v337
    %v466 = vpack.c.b16 %v340, %v339
    %v467 = vpack.c.b16 %v342, %v341
    %v468 = vpack.c.b16 %v344, %v343
    %v469 = vpack.c.b16 %v346, %v345
    %v470 = vpack.c.b16 %v348, %v347
    %v471 = vpack.c.b16 %v350, %v349
    %v472 = vpack.c.b16 %v352, %v351
    %v473 = vpack.c.b16 %v354, %v353
    %v474 = vpack.c.b16 %v356, %v355
    %v475 = vpack.c.b16 %v358, %v357
    %v476 = vpack.c.b16 %v360, %v359
    %v477 = vpack.c.b16 %v362, %v361
    %v478 = vpack.c.b16 %v364, %v363
    %v479 = vpack.c.b16 %v366, %v365
    %v480 = vpack.c.b16 %v368, %v367
    %v481 = vpack.c.b16 %v370, %v369
    %v482 = vpack.c.b16 %v372, %v371
    %v483 = vpack.c.b16 %v374, %v373
    %v484 = vpack.c.b16 %v376, %v375
    %v485 = vpack.c.b16 %v378, %v377
    %v486 = vpack.c.b16 %v380, %v379
    %v487 = vpack.c.b16 %v382, %v381
    %v488 = vpack.c.b16 %v384, %v383
    %v489 = vpack.c.b16 %v386, %v385
    %v490 = vpack.c.b16 %v388, %v387
    %v491 = vpack.c.b16 %v390, %v389
    %v492 = vpack.c.b16 %v392, %v391
    %v493 = vpack.c.b16 %v394, %v393
    %v494 = vpack.c.b16 %v396, %v395
    %v495 = vpack.c.b16 %v398, %v397
    %v496 = vpack.c.b16 %v400, %v399
    %v497 = vpack.c.b16 %v402, %v401
    %v498 = vpack.c.b16 %v404, %v403
    %v499 = vpack.c.b16 %v406, %v405
    %v500 = vpack.c.b16 %v408, %v407
    %v501 = vpack.c.b16 %v410, %v409
    %v502 = vpack.c.b16 %v412, %v411
    %v503 = vpack.c.b16 %v414, %v413
    %v504 = vpack.c.b16 %v416, %v415
    %v505 = vpack.c.b16 %v418, %v417
    %v506 = vpack.c.b16 %v420, %v419
    %v507 = vpack.c.b16 %v422, %v421
    %v508 = vpack.c.b16 %v424, %v423
    %v509 = vpack.c.b16 %v426, %v425
    %v510 = vpack.c.b16 %v428, %v427
    %v511 = vpack.c.b16 %v430, %v429
    %v512 = vpack.c.b16 %v432, %v431
    %v513 = vpack.c.b16 %v434, %v433
    %v514 = vpack.c.b16 %v436, %v435
    %v515 = vpack.c.b16 %v438, %v437
    %v516 = vpack.c.b16 %v440, %v439
    %v517 = vpack.c.b16 %v442, %v441
    %v518 = vpack.c.b16 %v444, %v443
    %v519 = vpack.c.b16 %v446, %v445
    %v520 = vpack.c.b16 %v448, %v447
    %v521 = vpack.c.b16 %v450, %v449
    %v522 = vpack.c.b16 %v452, %v451
    %v523 = vpack.c.b16 %v454, %v453
    %v524 = vpack.c.b16 %v456, %v455
    %v525 = vpack.c.b16 %v458, %v457
    %v526 = vpack.c.b16 %v460, %v459
    %v527 = vpack.c.b16 %v462, %v461
    %v528 = vpack.c.b16 %v464, %v463
    %593 = vmatprep.subr.bf16.mxu0 0
    %594 = vmatpush1.bf16.msra.mxu0 %v465
    %595 = vmatprep.subr.bf16.mxu0 0
    %596 = vmatpush1.bf16.msra.mxu0 %v466
    %597 = vmatprep.subr.bf16.mxu0 0
    %598 = vmatpush1.bf16.msra.mxu0 %v467
    %599 = vmatprep.subr.bf16.mxu0 0
    %600 = vmatpush1.bf16.msra.mxu0 %v468
    %601 = vmatprep.subr.bf16.mxu0 0
    %602 = vmatpush1.bf16.msra.mxu0 %v469
    %603 = vmatprep.subr.bf16.mxu0 0
    %604 = vmatpush1.bf16.msra.mxu0 %v470
    %605 = vmatprep.subr.bf16.mxu0 0
    %606 = vmatpush1.bf16.msra.mxu0 %v471
    %607 = vmatprep.subr.bf16.mxu0 0
    %608 = vmatpush1.bf16.msra.mxu0 %v472
    %609 = vmatprep.subr.bf16.mxu0 0
    %610 = vmatpush1.bf16.msra.mxu0 %v473
    %611 = vmatprep.subr.bf16.mxu0 0
    %612 = vmatpush1.bf16.msra.mxu0 %v474
    %613 = vmatprep.subr.bf16.mxu0 0
    %614 = vmatpush1.bf16.msra.mxu0 %v475
    %615 = vmatprep.subr.bf16.mxu0 0
    %616 = vmatpush1.bf16.msra.mxu0 %v476
    %617 = vmatprep.subr.bf16.mxu0 0
    %618 = vmatpush1.bf16.msra.mxu0 %v477
    %619 = vmatprep.subr.bf16.mxu0 0
    %620 = vmatpush1.bf16.msra.mxu0 %v478
    %621 = vmatprep.subr.bf16.mxu0 0
    %622 = vmatpush1.bf16.msra.mxu0 %v479
    %623 = vmatprep.subr.bf16.mxu0 0
    %624 = vmatpush1.bf16.msra.mxu0 %v480
    %625 = vmatprep.mubr.bf16.mxu0 %v194
    %626 = vmatmul.mubr.bf16.gmra.mrb[0].mxu0 %v193
    %v627 = vpop.f32.mrb[0].mxu0
    %v628 = vadd.f32 %v179, %v627
    %v629 = vpop.f32.mrb[0].mxu0
    %v630 = vpop.f32.mrb[0].mxu0
    %v631 = vpop.f32.mrb[0].mxu0
    %632 = vdwg.mxu0
    %633 = vmatprep.subr.bf16.mxu0 0
    %634 = vmatpush1.bf16.msra.mxu0 %v481
    %635 = vmatprep.subr.bf16.mxu0 0
    %636 = vmatpush1.bf16.msra.mxu0 %v482
    %637 = vmatprep.subr.bf16.mxu0 0
    %638 = vmatpush1.bf16.msra.mxu0 %v483
    %639 = vmatprep.subr.bf16.mxu0 0
    %640 = vmatpush1.bf16.msra.mxu0 %v484
    %641 = vmatprep.subr.bf16.mxu0 0
    %642 = vmatpush1.bf16.msra.mxu0 %v485
    %643 = vmatprep.subr.bf16.mxu0 0
    %644 = vmatpush1.bf16.msra.mxu0 %v486
    %645 = vmatprep.subr.bf16.mxu0 0
    %646 = vmatpush1.bf16.msra.mxu0 %v487
    %647 = vmatprep.subr.bf16.mxu0 0
    %648 = vmatpush1.bf16.msra.mxu0 %v488
    %649 = vmatprep.subr.bf16.mxu0 0
    %650 = vmatpush1.bf16.msra.mxu0 %v489
    %651 = vmatprep.subr.bf16.mxu0 0
    %652 = vmatpush1.bf16.msra.mxu0 %v490
    %653 = vmatprep.subr.bf16.mxu0 0
    %654 = vmatpush1.bf16.msra.mxu0 %v491
    %655 = vmatprep.subr.bf16.mxu0 0
    %656 = vmatpush1.bf16.msra.mxu0 %v492
    %657 = vmatprep.subr.bf16.mxu0 0
    %658 = vmatpush1.bf16.msra.mxu0 %v493
    %659 = vmatprep.subr.bf16.mxu0 0
    %660 = vmatpush1.bf16.msra.mxu0 %v494
    %661 = vmatprep.subr.bf16.mxu0 0
    %662 = vmatpush1.bf16.msra.mxu0 %v495
    %663 = vmatprep.subr.bf16.mxu0 0
    %664 = vmatpush1.bf16.msra.mxu0 %v496
    %665 = vmatprep.mubr.bf16.mxu0 %v196
    %666 = vmatmul.mubr.bf16.gmra.mrb[0].mxu0 %v195
    %v667 = vpop.f32.mrb[0].mxu0
    %v668 = vadd.f32 %v628, %v667
    %v669 = vpop.f32.mrb[0].mxu0
    %v670 = vpop.f32.mrb[0].mxu0
    %v671 = vpop.f32.mrb[0].mxu0
    %672 = vdwg.mxu0
    %673 = vmatprep.subr.bf16.mxu0 0
    %674 = vmatpush1.bf16.msra.mxu0 %v497
    %675 = vmatprep.subr.bf16.mxu0 0
    %676 = vmatpush1.bf16.msra.mxu0 %v498
    %677 = vmatprep.subr.bf16.mxu0 0
    %678 = vmatpush1.bf16.msra.mxu0 %v499
    %679 = vmatprep.subr.bf16.mxu0 0
    %680 = vmatpush1.bf16.msra.mxu0 %v500
    %681 = vmatprep.subr.bf16.mxu0 0
    %682 = vmatpush1.bf16.msra.mxu0 %v501
    %683 = vmatprep.subr.bf16.mxu0 0
    %684 = vmatpush1.bf16.msra.mxu0 %v502
    %685 = vmatprep.subr.bf16.mxu0 0
    %686 = vmatpush1.bf16.msra.mxu0 %v503
    %687 = vmatprep.subr.bf16.mxu0 0
    %688 = vmatpush1.bf16.msra.mxu0 %v504
    %689 = vmatprep.subr.bf16.mxu0 0
    %690 = vmatpush1.bf16.msra.mxu0 %v505
    %691 = vmatprep.subr.bf16.mxu0 0
    %692 = vmatpush1.bf16.msra.mxu0 %v506
    %693 = vmatprep.subr.bf16.mxu0 0
    %694 = vmatpush1.bf16.msra.mxu0 %v507
    %695 = vmatprep.subr.bf16.mxu0 0
    %696 = vmatpush1.bf16.msra.mxu0 %v508
    %697 = vmatprep.subr.bf16.mxu0 0
    %698 = vmatpush1.bf16.msra.mxu0 %v509
    %699 = vmatprep.subr.bf16.mxu0 0
    %700 = vmatpush1.bf16.msra.mxu0 %v510
    %701 = vmatprep.subr.bf16.mxu0 0
    %702 = vmatpush1.bf16.msra.mxu0 %v511
    %703 = vmatprep.subr.bf16.mxu0 0
    %704 = vmatpush1.bf16.msra.mxu0 %v512
    %705 = vmatprep.mubr.bf16.mxu0 %v198
    %706 = vmatmul.mubr.bf16.gmra.mrb[0].mxu0 %v197
    %v707 = vpop.f32.mrb[0].mxu0
    %v708 = vadd.f32 %v668, %v707
    %v709 = vpop.f32.mrb[0].mxu0
    %v710 = vpop.f32.mrb[0].mxu0
    %v711 = vpop.f32.mrb[0].mxu0
    %712 = vdwg.mxu0
    %713 = vmatprep.subr.bf16.mxu0 0
    %714 = vmatpush1.bf16.msra.mxu0 %v513
    %715 = vmatprep.subr.bf16.mxu0 0
    %716 = vmatpush1.bf16.msra.mxu0 %v514
    %717 = vmatprep.subr.bf16.mxu0 0
    %718 = vmatpush1.bf16.msra.mxu0 %v515
    %719 = vmatprep.subr.bf16.mxu0 0
    %720 = vmatpush1.bf16.msra.mxu0 %v516
    %721 = vmatprep.subr.bf16.mxu0 0
    %722 = vmatpush1.bf16.msra.mxu0 %v517
    %723 = vmatprep.subr.bf16.mxu0 0
    %724 = vmatpush1.bf16.msra.mxu0 %v518
    %725 = vmatprep.subr.bf16.mxu0 0
    %726 = vmatpush1.bf16.msra.mxu0 %v519
    %727 = vmatprep.subr.bf16.mxu0 0
    %728 = vmatpush1.bf16.msra.mxu0 %v520
    %729 = vmatprep.subr.bf16.mxu0 0
    %730 = vmatpush1.bf16.msra.mxu0 %v521
    %731 = vmatprep.subr.bf16.mxu0 0
    %732 = vmatpush1.bf16.msra.mxu0 %v522
    %733 = vmatprep.subr.bf16.mxu0 0
    %734 = vmatpush1.bf16.msra.mxu0 %v523
    %735 = vmatprep.subr.bf16.mxu0 0
    %736 = vmatpush1.bf16.msra.mxu0 %v524
    %737 = vmatprep.subr.bf16.mxu0 0
    %738 = vmatpush1.bf16.msra.mxu0 %v525
    %739 = vmatprep.subr.bf16.mxu0 0
    %740 = vmatpush1.bf16.msra.mxu0 %v526
    %741 = vmatprep.subr.bf16.mxu0 0
    %742 = vmatpush1.bf16.msra.mxu0 %v527
    %743 = vmatprep.subr.bf16.mxu0 0
    %744 = vmatpush1.bf16.msra.mxu0 %v528
    %745 = vmatprep.mubr.bf16.mxu0 %v200
    %746 = vmatmul.mubr.bf16.gmra.mrb[0].mxu0 %v199
    %v747 = vpop.f32.mrb[0].mxu0
    %v748 = vadd.f32 %v708, %v747
    %v749 = vpop.f32.mrb[0].mxu0
    %v750 = vpop.f32.mrb[0].mxu0
    %v751 = vpop.f32.mrb[0].mxu0
    %752 = vdwg.mxu0
    %v753 = vmax.f32 %v748, 0.0
    %v754 = vpack.c.bf16 %v753, %v753
    %v755 = vld [vmem:[%s3] sm:$0xf]
    %v756 = vld [vmem:[%s3 + $0x4] sm:$0xf]
    %v757 = vld [vmem:[%s3 + $0x8] sm:$0xf]
    %v758 = vld [vmem:[%s3 + $0xc] sm:$0xf]
    %v759 = vld [vmem:[%s3 + $0x10] sm:$0xf]
    %v760 = vld [vmem:[%s3 + $0x14] sm:$0xf]
    %v761 = vld [vmem:[%s3 + $0x18] sm:$0xf]
    %v762 = vld [vmem:[%s3 + $0x1c] sm:$0xf]
    %v763 = vld [vmem:[%s3 + $0x20] sm:$0xf]
    %v764 = vld [vmem:[%s3 + $0x24] sm:$0xf]
    %v765 = vld [vmem:[%s3 + $0x28] sm:$0xf]
    %v766 = vld [vmem:[%s3 + $0x2c] sm:$0xf]
    %v767 = vld [vmem:[%s3 + $0x30] sm:$0xf]
    %v768 = vld [vmem:[%s3 + $0x34] sm:$0xf]
    %v769 = vld [vmem:[%s3 + $0x38] sm:$0xf]
    %v770 = vld [vmem:[%s3 + $0x3c] sm:$0xf]
    %v771 = vld [vmem:[%s4] sm:$0x1]
    %v773 = vlaneseq
    %v774 = vshrl.u32 %v773, 7
    %v775 = vsub.s32 0, %v774
    %v776 = vrot.slane %v771, %v775
    %v794 = vunpack.c.l.b16 %v755
    %v795 = vunpack.c.l.b16 %v756
    %v796 = vunpack.c.l.b16 %v757
    %v797 = vunpack.c.l.b16 %v758
    %v798 = vunpack.c.l.b16 %v759
    %v799 = vunpack.c.l.b16 %v760
    %v800 = vunpack.c.l.b16 %v761
    %v801 = vunpack.c.l.b16 %v762
    %v802 = vunpack.c.l.b16 %v763
    %v803 = vunpack.c.l.b16 %v764
    %v804 = vunpack.c.l.b16 %v765
    %v805 = vunpack.c.l.b16 %v766
    %v806 = vunpack.c.l.b16 %v767
    %v807 = vunpack.c.l.b16 %v768
    %v808 = vunpack.c.l.b16 %v769
    %v809 = vunpack.c.l.b16 %v770
    %v810 = vpack.c.b16 %v795, %v794
    %v811 = vpack.c.b16 %v797, %v796
    %v812 = vpack.c.b16 %v799, %v798
    %v813 = vpack.c.b16 %v801, %v800
    %v814 = vpack.c.b16 %v803, %v802
    %v815 = vpack.c.b16 %v805, %v804
    %v816 = vpack.c.b16 %v807, %v806
    %v817 = vpack.c.b16 %v809, %v808
    %826 = vmatprep.subr.bf16.mxu0 0
    %827 = vmatpush1.bf16.msra.mxu0 %v810
    %828 = vmatprep.subr.bf16.mxu0 0
    %829 = vmatpush1.bf16.msra.mxu0 %v811
    %830 = vmatprep.subr.bf16.mxu0 0
    %831 = vmatpush1.bf16.msra.mxu0 %v812
    %832 = vmatprep.subr.bf16.mxu0 0
    %833 = vmatpush1.bf16.msra.mxu0 %v813
    %834 = vmatprep.subr.bf16.mxu0 0
    %835 = vmatpush1.bf16.msra.mxu0 %v814
    %836 = vmatprep.subr.bf16.mxu0 0
    %837 = vmatpush1.bf16.msra.mxu0 %v815
    %838 = vmatprep.subr.bf16.mxu0 0
    %839 = vmatpush1.bf16.msra.mxu0 %v816
    %840 = vmatprep.subr.bf16.mxu0 0
    %841 = vmatpush1.bf16.msra.mxu0 %v817
    %842 = vmatprep.subr.bf16.mxu0 0
    %843 = vmatpush1.bf16.msra.mxu0 0
    %844 = vmatprep.subr.bf16.mxu0 0
    %845 = vmatpush1.bf16.msra.mxu0 0
    %846 = vmatprep.subr.bf16.mxu0 0
    %847 = vmatpush1.bf16.msra.mxu0 0
    %848 = vmatprep.subr.bf16.mxu0 0
    %849 = vmatpush1.bf16.msra.mxu0 0
    %850 = vmatprep.subr.bf16.mxu0 0
    %851 = vmatpush1.bf16.msra.mxu0 0
    %852 = vmatprep.subr.bf16.mxu0 0
    %853 = vmatpush1.bf16.msra.mxu0 0
    %854 = vmatprep.subr.bf16.mxu0 0
    %855 = vmatpush1.bf16.msra.mxu0 0
    %856 = vmatprep.subr.bf16.mxu0 0
    %857 = vmatpush1.bf16.msra.mxu0 0
    %858 = vmatprep.mubr.bf16.mxu0 0
    %859 = vmatmul.mubr.bf16.gmra.mrb[0].mxu0 %v754
    %v860 = vpop.f32.mrb[0].mxu0
    %v861 = vadd.f32 %v776, %v860
    %v862 = vpop.f32.mrb[0].mxu0
    %v863 = vpop.f32.mrb[0].mxu0
    %v864 = vpop.f32.mrb[0].mxu0
    %865 = vdwg.mxu0
    %v866 = vmax.f32 %v861, 0.0
    %v867 = vpack.c.bf16 %v866, %v866
    %v868 = vld [vmem:[%s5] sm:$0xf]
    %v869 = vld [vmem:[%s5 + $0x4] sm:$0xf]
    %v870 = vld [vmem:[%s5 + $0x8] sm:$0xf]
    %v871 = vld [vmem:[%s5 + $0xc] sm:$0xf]
    %v872 = vld [vmem:[%s5 + $0x10] sm:$0xf]
    %v873 = vld [vmem:[%s5 + $0x14] sm:$0xf]
    %v874 = vld [vmem:[%s5 + $0x18] sm:$0xf]
    %v875 = vld [vmem:[%s5 + $0x1c] sm:$0xf]
    %v876 = vld [vmem:[%s5 + $0x20] sm:$0xf]
    %v877 = vld [vmem:[%s5 + $0x24] sm:$0xf]
    %v878 = vld [vmem:[%s5 + $0x28] sm:$0xf]
    %v879 = vld [vmem:[%s5 + $0x2c] sm:$0xf]
    %v880 = vld [vmem:[%s5 + $0x30] sm:$0xf]
    %v881 = vld [vmem:[%s5 + $0x34] sm:$0xf]
    %v882 = vld [vmem:[%s5 + $0x38] sm:$0xf]
    %v883 = vld [vmem:[%s5 + $0x3c] sm:$0xf]
    %v884 = vld [vmem:[%s6] sm:$0x1]
    %v886 = vlaneseq
    %v887 = vshrl.u32 %v886, 7
    %v888 = vsub.s32 0, %v887
    %v889 = vrot.slane %v884, %v888
    %v907 = vunpack.c.l.b16 %v868
    %v908 = vunpack.c.l.b16 %v869
    %v909 = vunpack.c.l.b16 %v870
    %v910 = vunpack.c.l.b16 %v871
    %v911 = vunpack.c.l.b16 %v872
    %v912 = vunpack.c.l.b16 %v873
    %v913 = vunpack.c.l.b16 %v874
    %v914 = vunpack.c.l.b16 %v875
    %v915 = vunpack.c.l.b16 %v876
    %v916 = vunpack.c.l.b16 %v877
    %v917 = vunpack.c.l.b16 %v878
    %v918 = vunpack.c.l.b16 %v879
    %v919 = vunpack.c.l.b16 %v880
    %v920 = vunpack.c.l.b16 %v881
    %v921 = vunpack.c.l.b16 %v882
    %v922 = vunpack.c.l.b16 %v883
    %v923 = vpack.c.b16 %v908, %v907
    %v924 = vpack.c.b16 %v910, %v909
    %v925 = vpack.c.b16 %v912, %v911
    %v926 = vpack.c.b16 %v914, %v913
    %v927 = vpack.c.b16 %v916, %v915
    %v928 = vpack.c.b16 %v918, %v917
    %v929 = vpack.c.b16 %v920, %v919
    %v930 = vpack.c.b16 %v922, %v921
    %939 = vmatprep.subr.bf16.mxu0 0
    %940 = vmatpush1.bf16.msra.mxu0 %v923
    %941 = vmatprep.subr.bf16.mxu0 0
    %942 = vmatpush1.bf16.msra.mxu0 %v924
    %943 = vmatprep.subr.bf16.mxu0 0
    %944 = vmatpush1.bf16.msra.mxu0 %v925
    %945 = vmatprep.subr.bf16.mxu0 0
    %946 = vmatpush1.bf16.msra.mxu0 %v926
    %947 = vmatprep.subr.bf16.mxu0 0
    %948 = vmatpush1.bf16.msra.mxu0 %v927
    %949 = vmatprep.subr.bf16.mxu0 0
    %950 = vmatpush1.bf16.msra.mxu0 %v928
    %951 = vmatprep.subr.bf16.mxu0 0
    %952 = vmatpush1.bf16.msra.mxu0 %v929
    %953 = vmatprep.subr.bf16.mxu0 0
    %954 = vmatpush1.bf16.msra.mxu0 %v930
    %955 = vmatprep.subr.bf16.mxu0 0
    %956 = vmatpush1.bf16.msra.mxu0 0
    %957 = vmatprep.subr.bf16.mxu0 0
    %958 = vmatpush1.bf16.msra.mxu0 0
    %959 = vmatprep.subr.bf16.mxu0 0
    %960 = vmatpush1.bf16.msra.mxu0 0
    %961 = vmatprep.subr.bf16.mxu0 0
    %962 = vmatpush1.bf16.msra.mxu0 0
    %963 = vmatprep.subr.bf16.mxu0 0
    %964 = vmatpush1.bf16.msra.mxu0 0
    %965 = vmatprep.subr.bf16.mxu0 0
    %966 = vmatpush1.bf16.msra.mxu0 0
    %967 = vmatprep.subr.bf16.mxu0 0
    %968 = vmatpush1.bf16.msra.mxu0 0
    %969 = vmatprep.subr.bf16.mxu0 0
    %970 = vmatpush1.bf16.msra.mxu0 0
    %971 = vmatprep.mubr.bf16.mxu0 0
    %972 = vmatmul.mubr.bf16.gmra.mrb[0].mxu0 %v867
    %v973 = vpop.f32.mrb[0].mxu0
    %v974 = vadd.f32 %v889, %v973
    %v975 = vpop.f32.mrb[0].mxu0
    %v976 = vpop.f32.mrb[0].mxu0
    %v977 = vpop.f32.mrb[0].mxu0
    %978 = vdwg.mxu0
    %979 = vmax.xlane.f32.xlu0 %v974
    %v980 = vpop.xlane.xlu0 %979
    %v981 = vsub.f32 %v974, %v980
    %v982 = vmul.f32 %v981, 1.442695
    %v983 = vpow.pop %v982
    %984 = vadd.xlane.f32.xlu0 %v983
    %v985 = vpop.xlane.xlu0 %984
    %v986 = vrcp.pop %v985
    %v987 = vmul.f32 1.0, %v986
    %v988 = vmul.f32 %v983, %v987
    %989 = vst [vmem:[#allocation5] sm:$0xff] %v988
    // Predicated region
    $region34: #{forward_padded.1} parent=1 // pred_check
      _
    $region35: #{forward_padded.1} parent=1 // pred_check_branch
      %991 = sbr.rel (0) target = $region37
    $region36: #{forward_padded.1} parent=1 // pred_region
      %s993 = ssub.s32 128, 128
      %994 = vsyncadd [#allocation4], %s993
      %s996 = sshll.u32 [#allocation5], 4
      %s997 = int_to_ptr.vmem [resolvable:$true] %s996
      %999 = dma.vmem_to_hbm [thread:$0]  %s997, 128, %s7, [#allocation4]
    $region37: #{forward_padded.1} parent=1 // pred_fallthru
      _
    // Predicated region
    $region38: #{forward_padded.1} parent=1 // pred_check
      _
    $region39: #{forward_padded.1} parent=1 // pred_check_branch
      %1001 = sbr.rel (0) target = $region41
    $region40: #{forward_padded.1} parent=1 // pred_region
      %1002 = dma.done [#allocation4], 128
    $region41: #{forward_padded.1} parent=1 // pred_fallthru
      _
    %1003 = vsyncpa [#allocation3], 1
    %1004 = vsyncpa [#allocation4], 1

</llo_original>
